<compile_context>
chip_gen: v6e
topology: v6e:2x2x1
jax: 0.10.0
libtpu: 0.0.40
codegen_flags: <defaults>
</compile_context>

<pallas_src>
import functools
import math

import jax
import jax.numpy as jnp
from jax.experimental import pallas as pl
from jax.experimental.pallas import tpu as pltpu


# ---------------------------------------------------------------------------
# Tunables
# ---------------------------------------------------------------------------
_MAX_TILE = 256                        # gathered rows per grid step (multiple of 8)
_VMEM_TABLE_BYTES = 4 * 1024 * 1024    # tables <= this use the in-VMEM fast path
# TODO(synk): per-generation threshold (v7x has 64 MiB VMEM vs 128 MiB on v5e/v6e);
#             4 MiB is conservative and safe under the default scoped VMEM limit everywhere.


def _round_up(x: int, m: int) -> int:
    return ((x + m - 1) // m) * m


# ---------------------------------------------------------------------------
# Kernel bodies
# ---------------------------------------------------------------------------
def _make_hbm_gather_kernel(tile: int):
    """Batched DMA gather: table stays in HBM, `tile` row copies are issued per
    grid step straight into the (tile, E) output VMEM block, then waited on."""

    def kernel(idx_ref, table_hbm, out_ref, sem):
        base = pl.program_id(0) * tile
        # Issue all row DMAs (HBM -> output VMEM block). All `tile` copies are
        # in flight simultaneously, which hides per-row HBM latency.
        for r in range(tile):
            row = idx_ref[base + r]
            pltpu.make_async_copy(
                table_hbm.at[pl.ds(row, 1), :],
                out_ref.at[pl.ds(r, 1), :],
                sem.at[0],
            ).start()
        # Wait for every copy (all copies are the same size and share one sem;
        # the source index of the wait descriptor is irrelevant).
        for r in range(tile):
            pltpu.make_async_copy(
                table_hbm.at[pl.ds(0, 1), :],
                out_ref.at[pl.ds(r, 1), :],
                sem.at[0],
            ).wait()

    return kernel


def _make_vmem_gather_kernel(tile: int):
    """Small-table fast path: whole table resident in VMEM; gather is a set of
    in-VMEM dynamic row reads driven by the scalar-prefetched indices."""

    def kernel(idx_ref, table_ref, out_ref):
        base = pl.program_id(0) * tile
        for r in range(tile):
            row = idx_ref[base + r]
            out_ref[pl.ds(r, 1), :] = table_ref[pl.ds(row, 1), :]

    return kernel


# ---------------------------------------------------------------------------
# Pallas-call wrappers
# ---------------------------------------------------------------------------
@functools.partial(jax.jit, static_argnums=(2,))
def _gather_rows(table: jax.Array, indices: jax.Array, use_vmem_path: bool) -> jax.Array:
    """table[indices] via Pallas.  table: (N, E) f32, indices: (M,) int -> (M, E)."""
    num_nodes, embed_size = table.shape
    num_indices = indices.shape[0]

    # Clamp (matches jnp gather semantics; prevents data-dependent OOB DMA).
    idx = jnp.clip(indices.astype(jnp.int32), 0, num_nodes - 1)

    # Lane/sublane-dense output tile.
    tile = min(_MAX_TILE, _round_up(num_indices, 8))
    num_padded = _round_up(num_indices, tile)
    if num_padded != num_indices:
        idx = jnp.pad(idx, (0, num_padded - num_indices))  # pads with valid row 0

    grid = (num_padded // tile,)
    out_shape = jax.ShapeDtypeStruct((num_padded, embed_size), table.dtype)
    out_spec = pl.BlockSpec((tile, embed_size), lambda i, idx_ref: (i, 0))

    if use_vmem_path:
        grid_spec = pltpu.PrefetchScalarGridSpec(
            num_scalar_prefetch=1,
            grid=grid,
            in_specs=[
                # Whole table as a single resident VMEM block.
                pl.BlockSpec((num_nodes, embed_size), lambda i, idx_ref: (0, 0)),
            ],
            out_specs=out_spec,
        )
        kernel = _make_vmem_gather_kernel(tile)
    else:
        grid_spec = pltpu.PrefetchScalarGridSpec(
            num_scalar_prefetch=1,
            grid=grid,
            in_specs=[pl.BlockSpec(memory_space=pl.ANY)],  # raw HBM ref, manual DMA
            out_specs=out_spec,
            scratch_shapes=[pltpu.SemaphoreType.DMA((1,))],
        )
        kernel = _make_hbm_gather_kernel(tile)

    gathered = pl.pallas_call(
        kernel,
        out_shape=out_shape,
        grid_spec=grid_spec,
        compiler_params=pltpu.CompilerParams(
            # Independent output blocks -> shard across both v7x TensorCores.
            dimension_semantics=("parallel",),
        ),
    )(idx, table)

    return gathered[:num_indices]


def embedding_lookup(table: jax.Array, indices: jax.Array) -> jax.Array:
    """Public gather entry: picks the in-VMEM fast path for small tables."""
    num_nodes, embed_size = table.shape
    if indices.shape[0] == 0:
        return jnp.zeros((0, embed_size), table.dtype)
    table_bytes = num_nodes * embed_size * jnp.dtype(table.dtype).itemsize
    use_vmem = table_bytes <= _VMEM_TABLE_BYTES
    return _gather_rows(table, indices, use_vmem)


# ---------------------------------------------------------------------------
# Module
# ---------------------------------------------------------------------------
def xavier_uniform(key, shape, dtype=jnp.float32):
    """Matches torch.nn.init.xavier_uniform_ for a 2-D tensor (gain=1)."""
    fan_out, fan_in = shape[0], shape[1]
    bound = math.sqrt(6.0 / (fan_in + fan_out))
    return jax.random.uniform(key, shape, dtype=dtype, minval=-bound, maxval=bound)


class RelGraphEmbed:
    """JAX/Pallas port of the featureless-heterograph embedding layer.

    All node-type tables (same embed_size) are stacked into one parameter array
    with per-type row offsets so a forward() over many node types is a single
    Pallas launch.
    """

    def __init__(self, num_nodes_per_ntype: dict, embed_size: int,
                 exclude=(), key=None):
        if key is None:
            key = jax.random.PRNGKey(0)
        self.embed_size = embed_size
        self._offsets = {}   # ntype -> (row offset, num rows)
        tables = []
        offset = 0
        for i, (ntype, n_nodes) in enumerate(sorted(num_nodes_per_ntype.items())):
            if ntype in exclude:
                continue
            subkey = jax.random.fold_in(key, i)
            tables.append(xavier_uniform(subkey, (n_nodes, embed_size)))
            self._offsets[ntype] = (offset, n_nodes)
            offset += n_nodes
        if tables:
            self._stacked = jnp.concatenate(tables, axis=0)
        else:
            self._stacked = jnp.zeros((0, embed_size), jnp.float32)
        # TODO(synk): optionally store the stacked table in bfloat16 to halve gather bytes.

    @property
    def embeds(self):
        return {nt: self._stacked[off:off + n]
                for nt, (off, n) in self._offsets.items()}

    def forward(self, indices=None, block=None):
        # `block` is unused in the reference forward as well.
        if indices is None:
            return self.embeds
        keys = list(indices.keys())
        # Shift each type's indices by its row offset in the stacked table and
        # gather everything with ONE kernel launch.
        shifted, sizes = [], []
        for k in keys:
            idx_k = jnp.asarray(indices[k], jnp.int32)
            off, n = self._offsets[k]
            shifted.append(jnp.clip(idx_k, 0, n - 1) + off)
            sizes.append(idx_k.shape[0])
        flat = shifted[0] if len(shifted) == 1 else jnp.concatenate(shifted, axis=0)
        gathered = embedding_lookup(self._stacked, flat)
        out, start = {}, 0
        for k, n in zip(keys, sizes):
            out[k] = gathered[start:start + n]
            start += n
        return out

    __call__ = forward


# ---------------------------------------------------------------------------
# Self-test
# ---------------------------------------------------------------------------
if __name__ == "__main__":
    key = jax.random.PRNGKey(0)

    # Small synthetic heterograph: two node types, no natural features.
    num_nodes_per_ntype = {"user": 16, "item": 24}
    embed_size = 128  # lane-dense embed dim

    module = RelGraphEmbed(num_nodes_per_ntype, embed_size, exclude=[], key=key)

    # forward(None) -> full parameter dict.
    full = module()
    assert full["user"].shape == (16, embed_size)
    assert full["item"].shape == (24, embed_size)

    # forward(indices) -> row gather (single Pallas launch over the stacked table;
    # small tables use the VMEM fast path).
    idx_key_u, idx_key_i = jax.random.split(jax.random.fold_in(key, 100))
    indices = {
        "user": jax.random.randint(idx_key_u, (8,), 0, 16, dtype=jnp.int32),
        "item": jax.random.randint(idx_key_i, (8,), 0, 24, dtype=jnp.int32),
    }
    out = module(indices)
    out = jax.tree_util.tree_map(jax.block_until_ready, out)

    for k in indices:
        ref = module.embeds[k][indices[k]]
        assert out[k].shape == (indices[k].shape[0], embed_size)
        assert out[k].dtype == jnp.float32
        assert jnp.allclose(out[k], ref), f"mismatch for ntype {k} (VMEM path)"

    # Also exercise the batched HBM-DMA gather path explicitly (used for large tables).
    item_tbl = module.embeds["item"]
    hbm_out = _gather_rows(item_tbl, indices["item"], False)
    hbm_out = jax.block_until_ready(hbm_out)
    assert jnp.allclose(hbm_out, item_tbl[indices["item"]]), "mismatch (HBM DMA path)"

    print("KERNEL_OK")
</pallas_src>

<mosaic_0001>
module attributes {stable_mosaic.version = 11 : i64} {
  func.func @kernel(%arg0: i32, %arg1: memref<16xi32, #tpu.memory_space<smem>>, %arg2: memref<40x128xf32, #tpu.memory_space<vmem>>, %arg3: memref<16x128xf32, #tpu.memory_space<vmem>>) attributes {dimension_semantics = [#tpu.dimension_semantics<parallel>], iteration_bounds = array<i64: 1>, scalar_prefetch = 1 : i64, scratch_operands = 0 : i64, tpu.core_type = #tpu.core_type<tc>, window_params = [{pipeline_mode = #tpu.pipeline_mode<synchronous>, transform_indices = @transform_0, window_bounds = array<i64: 40, 128>}, {transform_indices = @transform_1, window_bounds = array<i64: 16, 128>}]} {
    %c16_i32 = arith.constant 16 : i32
    %0 = arith.muli %arg0, %c16_i32 : i32
    %c0_i32 = arith.constant 0 : i32
    %1 = arith.addi %0, %c0_i32 : i32
    %2 = arith.index_cast %1 : i32 to index
    %3 = memref.load %arg1[%2] : memref<16xi32, #tpu.memory_space<smem>>
    %4 = arith.index_cast %3 : i32 to index
    %c0 = arith.constant 0 : index
    %5 = vector.load %arg2[%4, %c0] : memref<40x128xf32, #tpu.memory_space<vmem>>, vector<1x128xf32>
    %c0_0 = arith.constant 0 : index
    %c0_1 = arith.constant 0 : index
    %6 = vector.load %arg3[%c0_0, %c0_1] : memref<16x128xf32, #tpu.memory_space<vmem>>, vector<1x128xf32>
    tpu.vector_store %arg3[%c0_0, %c0_1], %5 {strides = array<i32>} : memref<16x128xf32, #tpu.memory_space<vmem>>, vector<1x128xf32>,
    %c1_i32 = arith.constant 1 : i32
    %7 = arith.addi %0, %c1_i32 : i32
    %8 = arith.index_cast %7 : i32 to index
    %9 = memref.load %arg1[%8] : memref<16xi32, #tpu.memory_space<smem>>
    %10 = arith.index_cast %9 : i32 to index
    %c0_2 = arith.constant 0 : index
    %11 = vector.load %arg2[%10, %c0_2] : memref<40x128xf32, #tpu.memory_space<vmem>>, vector<1x128xf32>
    %c1 = arith.constant 1 : index
    %c0_3 = arith.constant 0 : index
    %12 = vector.load %arg3[%c1, %c0_3] : memref<16x128xf32, #tpu.memory_space<vmem>>, vector<1x128xf32>
    tpu.vector_store %arg3[%c1, %c0_3], %11 {strides = array<i32>} : memref<16x128xf32, #tpu.memory_space<vmem>>, vector<1x128xf32>,
    %c2_i32 = arith.constant 2 : i32
    %13 = arith.addi %0, %c2_i32 : i32
    %14 = arith.index_cast %13 : i32 to index
    %15 = memref.load %arg1[%14] : memref<16xi32, #tpu.memory_space<smem>>
    %16 = arith.index_cast %15 : i32 to index
    %c0_4 = arith.constant 0 : index
    %17 = vector.load %arg2[%16, %c0_4] : memref<40x128xf32, #tpu.memory_space<vmem>>, vector<1x128xf32>
    %c2 = arith.constant 2 : index
    %c0_5 = arith.constant 0 : index
    %18 = vector.load %arg3[%c2, %c0_5] : memref<16x128xf32, #tpu.memory_space<vmem>>, vector<1x128xf32>
    tpu.vector_store %arg3[%c2, %c0_5], %17 {strides = array<i32>} : memref<16x128xf32, #tpu.memory_space<vmem>>, vector<1x128xf32>,
    %c3_i32 = arith.constant 3 : i32
    %19 = arith.addi %0, %c3_i32 : i32
    %20 = arith.index_cast %19 : i32 to index
    %21 = memref.load %arg1[%20] : memref<16xi32, #tpu.memory_space<smem>>
    %22 = arith.index_cast %21 : i32 to index
    %c0_6 = arith.constant 0 : index
    %23 = vector.load %arg2[%22, %c0_6] : memref<40x128xf32, #tpu.memory_space<vmem>>, vector<1x128xf32>
    %c3 = arith.constant 3 : index
    %c0_7 = arith.constant 0 : index
    %24 = vector.load %arg3[%c3, %c0_7] : memref<16x128xf32, #tpu.memory_space<vmem>>, vector<1x128xf32>
    tpu.vector_store %arg3[%c3, %c0_7], %23 {strides = array<i32>} : memref<16x128xf32, #tpu.memory_space<vmem>>, vector<1x128xf32>,
    %c4_i32 = arith.constant 4 : i32
    %25 = arith.addi %0, %c4_i32 : i32
    %26 = arith.index_cast %25 : i32 to index
    %27 = memref.load %arg1[%26] : memref<16xi32, #tpu.memory_space<smem>>
    %28 = arith.index_cast %27 : i32 to index
    %c0_8 = arith.constant 0 : index
    %29 = vector.load %arg2[%28, %c0_8] : memref<40x128xf32, #tpu.memory_space<vmem>>, vector<1x128xf32>
    %c4 = arith.constant 4 : index
    %c0_9 = arith.constant 0 : index
    %30 = vector.load %arg3[%c4, %c0_9] : memref<16x128xf32, #tpu.memory_space<vmem>>, vector<1x128xf32>
    tpu.vector_store %arg3[%c4, %c0_9], %29 {strides = array<i32>} : memref<16x128xf32, #tpu.memory_space<vmem>>, vector<1x128xf32>,
    %c5_i32 = arith.constant 5 : i32
    %31 = arith.addi %0, %c5_i32 : i32
    %32 = arith.index_cast %31 : i32 to index
    %33 = memref.load %arg1[%32] : memref<16xi32, #tpu.memory_space<smem>>
    %34 = arith.index_cast %33 : i32 to index
    %c0_10 = arith.constant 0 : index
    %35 = vector.load %arg2[%34, %c0_10] : memref<40x128xf32, #tpu.memory_space<vmem>>, vector<1x128xf32>
    %c5 = arith.constant 5 : index
    %c0_11 = arith.constant 0 : index
    %36 = vector.load %arg3[%c5, %c0_11] : memref<16x128xf32, #tpu.memory_space<vmem>>, vector<1x128xf32>
    tpu.vector_store %arg3[%c5, %c0_11], %35 {strides = array<i32>} : memref<16x128xf32, #tpu.memory_space<vmem>>, vector<1x128xf32>,
    %c6_i32 = arith.constant 6 : i32
    %37 = arith.addi %0, %c6_i32 : i32
    %38 = arith.index_cast %37 : i32 to index
    %39 = memref.load %arg1[%38] : memref<16xi32, #tpu.memory_space<smem>>
    %40 = arith.index_cast %39 : i32 to index
    %c0_12 = arith.constant 0 : index
    %41 = vector.load %arg2[%40, %c0_12] : memref<40x128xf32, #tpu.memory_space<vmem>>, vector<1x128xf32>
    %c6 = arith.constant 6 : index
    %c0_13 = arith.constant 0 : index
    %42 = vector.load %arg3[%c6, %c0_13] : memref<16x128xf32, #tpu.memory_space<vmem>>, vector<1x128xf32>
    tpu.vector_store %arg3[%c6, %c0_13], %41 {strides = array<i32>} : memref<16x128xf32, #tpu.memory_space<vmem>>, vector<1x128xf32>,
    %c7_i32 = arith.constant 7 : i32
    %43 = arith.addi %0, %c7_i32 : i32
    %44 = arith.index_cast %43 : i32 to index
    %45 = memref.load %arg1[%44] : memref<16xi32, #tpu.memory_space<smem>>
    %46 = arith.index_cast %45 : i32 to index
    %c0_14 = arith.constant 0 : index
    %47 = vector.load %arg2[%46, %c0_14] : memref<40x128xf32, #tpu.memory_space<vmem>>, vector<1x128xf32>
    %c7 = arith.constant 7 : index
    %c0_15 = arith.constant 0 : index
    %48 = vector.load %arg3[%c7, %c0_15] : memref<16x128xf32, #tpu.memory_space<vmem>>, vector<1x128xf32>
    tpu.vector_store %arg3[%c7, %c0_15], %47 {strides = array<i32>} : memref<16x128xf32, #tpu.memory_space<vmem>>, vector<1x128xf32>,
    %c8_i32 = arith.constant 8 : i32
    %49 = arith.addi %0, %c8_i32 : i32
    %50 = arith.index_cast %49 : i32 to index
    %51 = memref.load %arg1[%50] : memref<16xi32, #tpu.memory_space<smem>>
    %52 = arith.index_cast %51 : i32 to index
    %c0_16 = arith.constant 0 : index
    %53 = vector.load %arg2[%52, %c0_16] : memref<40x128xf32, #tpu.memory_space<vmem>>, vector<1x128xf32>
    %c8 = arith.constant 8 : index
    %c0_17 = arith.constant 0 : index
    %54 = vector.load %arg3[%c8, %c0_17] : memref<16x128xf32, #tpu.memory_space<vmem>>, vector<1x128xf32>
    tpu.vector_store %arg3[%c8, %c0_17], %53 {strides = array<i32>} : memref<16x128xf32, #tpu.memory_space<vmem>>, vector<1x128xf32>,
    %c9_i32 = arith.constant 9 : i32
    %55 = arith.addi %0, %c9_i32 : i32
    %56 = arith.index_cast %55 : i32 to index
    %57 = memref.load %arg1[%56] : memref<16xi32, #tpu.memory_space<smem>>
    %58 = arith.index_cast %57 : i32 to index
    %c0_18 = arith.constant 0 : index
    %59 = vector.load %arg2[%58, %c0_18] : memref<40x128xf32, #tpu.memory_space<vmem>>, vector<1x128xf32>
    %c9 = arith.constant 9 : index
    %c0_19 = arith.constant 0 : index
    %60 = vector.load %arg3[%c9, %c0_19] : memref<16x128xf32, #tpu.memory_space<vmem>>, vector<1x128xf32>
    tpu.vector_store %arg3[%c9, %c0_19], %59 {strides = array<i32>} : memref<16x128xf32, #tpu.memory_space<vmem>>, vector<1x128xf32>,
    %c10_i32 = arith.constant 10 : i32
    %61 = arith.addi %0, %c10_i32 : i32
    %62 = arith.index_cast %61 : i32 to index
    %63 = memref.load %arg1[%62] : memref<16xi32, #tpu.memory_space<smem>>
    %64 = arith.index_cast %63 : i32 to index
    %c0_20 = arith.constant 0 : index
    %65 = vector.load %arg2[%64, %c0_20] : memref<40x128xf32, #tpu.memory_space<vmem>>, vector<1x128xf32>
    %c10 = arith.constant 10 : index
    %c0_21 = arith.constant 0 : index
    %66 = vector.load %arg3[%c10, %c0_21] : memref<16x128xf32, #tpu.memory_space<vmem>>, vector<1x128xf32>
    tpu.vector_store %arg3[%c10, %c0_21], %65 {strides = array<i32>} : memref<16x128xf32, #tpu.memory_space<vmem>>, vector<1x128xf32>,
    %c11_i32 = arith.constant 11 : i32
    %67 = arith.addi %0, %c11_i32 : i32
    %68 = arith.index_cast %67 : i32 to index
    %69 = memref.load %arg1[%68] : memref<16xi32, #tpu.memory_space<smem>>
    %70 = arith.index_cast %69 : i32 to index
    %c0_22 = arith.constant 0 : index
    %71 = vector.load %arg2[%70, %c0_22] : memref<40x128xf32, #tpu.memory_space<vmem>>, vector<1x128xf32>
    %c11 = arith.constant 11 : index
    %c0_23 = arith.constant 0 : index
    %72 = vector.load %arg3[%c11, %c0_23] : memref<16x128xf32, #tpu.memory_space<vmem>>, vector<1x128xf32>
    tpu.vector_store %arg3[%c11, %c0_23], %71 {strides = array<i32>} : memref<16x128xf32, #tpu.memory_space<vmem>>, vector<1x128xf32>,
    %c12_i32 = arith.constant 12 : i32
    %73 = arith.addi %0, %c12_i32 : i32
    %74 = arith.index_cast %73 : i32 to index
    %75 = memref.load %arg1[%74] : memref<16xi32, #tpu.memory_space<smem>>
    %76 = arith.index_cast %75 : i32 to index
    %c0_24 = arith.constant 0 : index
    %77 = vector.load %arg2[%76, %c0_24] : memref<40x128xf32, #tpu.memory_space<vmem>>, vector<1x128xf32>
    %c12 = arith.constant 12 : index
    %c0_25 = arith.constant 0 : index
    %78 = vector.load %arg3[%c12, %c0_25] : memref<16x128xf32, #tpu.memory_space<vmem>>, vector<1x128xf32>
    tpu.vector_store %arg3[%c12, %c0_25], %77 {strides = array<i32>} : memref<16x128xf32, #tpu.memory_space<vmem>>, vector<1x128xf32>,
    %c13_i32 = arith.constant 13 : i32
    %79 = arith.addi %0, %c13_i32 : i32
    %80 = arith.index_cast %79 : i32 to index
    %81 = memref.load %arg1[%80] : memref<16xi32, #tpu.memory_space<smem>>
    %82 = arith.index_cast %81 : i32 to index
    %c0_26 = arith.constant 0 : index
    %83 = vector.load %arg2[%82, %c0_26] : memref<40x128xf32, #tpu.memory_space<vmem>>, vector<1x128xf32>
    %c13 = arith.constant 13 : index
    %c0_27 = arith.constant 0 : index
    %84 = vector.load %arg3[%c13, %c0_27] : memref<16x128xf32, #tpu.memory_space<vmem>>, vector<1x128xf32>
    tpu.vector_store %arg3[%c13, %c0_27], %83 {strides = array<i32>} : memref<16x128xf32, #tpu.memory_space<vmem>>, vector<1x128xf32>,
    %c14_i32 = arith.constant 14 : i32
    %85 = arith.addi %0, %c14_i32 : i32
    %86 = arith.index_cast %85 : i32 to index
    %87 = memref.load %arg1[%86] : memref<16xi32, #tpu.memory_space<smem>>
    %88 = arith.index_cast %87 : i32 to index
    %c0_28 = arith.constant 0 : index
    %89 = vector.load %arg2[%88, %c0_28] : memref<40x128xf32, #tpu.memory_space<vmem>>, vector<1x128xf32>
    %c14 = arith.constant 14 : index
    %c0_29 = arith.constant 0 : index
    %90 = vector.load %arg3[%c14, %c0_29] : memref<16x128xf32, #tpu.memory_space<vmem>>, vector<1x128xf32>
    tpu.vector_store %arg3[%c14, %c0_29], %89 {strides = array<i32>} : memref<16x128xf32, #tpu.memory_space<vmem>>, vector<1x128xf32>,
    %c15_i32 = arith.constant 15 : i32
    %91 = arith.addi %0, %c15_i32 : i32
    %92 = arith.index_cast %91 : i32 to index
    %93 = memref.load %arg1[%92] : memref<16xi32, #tpu.memory_space<smem>>
    %94 = arith.index_cast %93 : i32 to index
    %c0_30 = arith.constant 0 : index
    %95 = vector.load %arg2[%94, %c0_30] : memref<40x128xf32, #tpu.memory_space<vmem>>, vector<1x128xf32>
    %c15 = arith.constant 15 : index
    %c0_31 = arith.constant 0 : index
    %96 = vector.load %arg3[%c15, %c0_31] : memref<16x128xf32, #tpu.memory_space<vmem>>, vector<1x128xf32>
    tpu.vector_store %arg3[%c15, %c0_31], %95 {strides = array<i32>} : memref<16x128xf32, #tpu.memory_space<vmem>>, vector<1x128xf32>,
    return
  }
  func.func @transform_0(%arg0: i32, %arg1: memref<16xi32, #tpu.memory_space<smem>>) -> (i32, i32) {
    %c0_i32 = arith.constant 0 : i32
    %c0_i32_0 = arith.constant 0 : i32
    %c0_i32_1 = arith.constant 0 : i32
    return %c0_i32, %c0_i32_0 : i32, i32
  }
  func.func @transform_1(%arg0: i32, %arg1: memref<16xi32, #tpu.memory_space<smem>>) -> (i32, i32) {
    %c0_i32 = arith.constant 0 : i32
    %c0_i32_0 = arith.constant 0 : i32
    return %arg0, %c0_i32 : i32, i32
  }
}

</mosaic_0001>

<llo_original>
// kernel: _gather_rows.1
$region0: #{_gather_rows.1}
  #allocation0 [shape = 'u32[]', space=smem, size = 0x4, offset = 0x4, fixed_abs, tag = 'smem constant byte address 0x4 - core index']
  #allocation1 [shape = 'u32[144,128]{1,0:T(1,128)}', space=vmem, size = 0x12000, scoped, tag = 'internal scratch']
  #allocation2 [shape = 's32[1]{0}', space=sflag, size = 0x4, scoped, tag = 'scoped memory for _gather_rows.1']
  #allocation3 [shape = 'u8[512]{0}', space=smem, size = 0x200, scoped, tag = 'prefetched SMEM operand 0']
  %s0 = inlined_call_operand.vmem [shape: s32[16], index: 0, kind: input, shape index: {}]
  %s1 = inlined_call_operand.hbm [shape: f32[40,128], index: 1, kind: input, shape index: {}]
  %s2 = inlined_call_operand.hbm [shape: f32[16,128], index: 2, kind: output, shape index: {}]
  %s3 = sld [smem:[#allocation0]]
  $region18: #{_gather_rows.1} parent=0
    _
  %s5 = ssub.s32 1, %s3
  %s6 = scalar_select 0, %s5, %s3
  %s7 = sshll.u32 %s0, 4
  %s8 = int_to_ptr.vmem [resolvable:$true] %s7
  %10 = dma.vmem_to_smem %s8, 16, [#allocation3], [#allocation2]
  %11 = dma.done [#allocation2], 16
  %12 = sfence
  $region1: #{_gather_rows.1} parent=0
    #allocation4 [shape = 'u8[20480]{0}', space=vmem, size = 0x5000, scoped, tag = 'input window, operand 1, single buffered']
    #allocation5 [shape = 's32[1]{0}', space=sflag, size = 0x4, scoped, tag = 'scoped memory for _gather_rows.1']
    #allocation6 [shape = 's32[1]{0}', space=sflag, size = 0x4, scoped, tag = 'scoped memory for _gather_rows.1']
    #allocation7 [shape = 'u8[8192]{0}', space=vmem, size = 0x2000, scoped, tag = 'output window, operand 0, single buffered']
    %13 = vsyncpa [#allocation5], 0
    %14 = vsyncpa [#allocation6], 0
    // Predicated region
    $region2: #{_gather_rows.1} parent=1 // pred_check
      _
    $region3: #{_gather_rows.1} parent=1 // pred_check_branch
      %16 = sbr.rel (0) target = $region5
    $region4: #{_gather_rows.1} parent=1 // pred_region
      %s18 = ssub.s32 640, 640
      %19 = vsyncadd [#allocation5], %s18
      %s20 = sshll.u32 [#allocation4], 4
      %s21 = int_to_ptr.vmem [resolvable:$true] %s20
      %26 = dma.hbm_to_vmem [thread:$0]  %s1, 640, %s21, [#allocation5], 128, 128, 8
    $region5: #{_gather_rows.1} parent=1 // pred_fallthru
      _
    // Predicated region
    $region6: #{_gather_rows.1} parent=1 // pred_check
      _
    $region7: #{_gather_rows.1} parent=1 // pred_check_branch
      %28 = sbr.rel (0) target = $region9
    $region8: #{_gather_rows.1} parent=1 // pred_region
      %29 = dma.done [#allocation5], 640
    $region9: #{_gather_rows.1} parent=1 // pred_fallthru
      _
    %s30 = smul.u32 0, 16
    %s31 = sld [smem:[#allocation3 + %s30]]
    %s32 = scalar_lea.vmem [#allocation4], %s31
    %v33 = vld [vmem:[%s32] sm:$0x1]
    %34 = vst [vmem:[#allocation7] sm:$0x1] %v33
    %s35 = sadd.s32 %s30, 1
    %s36 = sld [smem:[#allocation3 + %s35]]
    %s37 = scalar_lea.vmem [#allocation4], %s36
    %v38 = vld [vmem:[%s37] sm:$0x1]
    %39 = vst [vmem:[#allocation7 + $0x1] sm:$0x1] %v38
    %s40 = sadd.s32 %s30, 2
    %s41 = sld [smem:[#allocation3 + %s40]]
    %s42 = scalar_lea.vmem [#allocation4], %s41
    %v43 = vld [vmem:[%s42] sm:$0x1]
    %44 = vst [vmem:[#allocation7 + $0x2] sm:$0x1] %v43
    %s45 = sadd.s32 %s30, 3
    %s46 = sld [smem:[#allocation3 + %s45]]
    %s47 = scalar_lea.vmem [#allocation4], %s46
    %v48 = vld [vmem:[%s47] sm:$0x1]
    %49 = vst [vmem:[#allocation7 + $0x3] sm:$0x1] %v48
    %s50 = sadd.s32 %s30, 4
    %s51 = sld [smem:[#allocation3 + %s50]]
    %s52 = scalar_lea.vmem [#allocation4], %s51
    %v53 = vld [vmem:[%s52] sm:$0x1]
    %54 = vst [vmem:[#allocation7 + $0x4] sm:$0x1] %v53
    %s55 = sadd.s32 %s30, 5
    %s56 = sld [smem:[#allocation3 + %s55]]
    %s57 = scalar_lea.vmem [#allocation4], %s56
    %v58 = vld [vmem:[%s57] sm:$0x1]
    %59 = vst [vmem:[#allocation7 + $0x5] sm:$0x1] %v58
    %s60 = sadd.s32 %s30, 6
    %s61 = sld [smem:[#allocation3 + %s60]]
    %s62 = scalar_lea.vmem [#allocation4], %s61
    %v63 = vld [vmem:[%s62] sm:$0x1]
    %64 = vst [vmem:[#allocation7 + $0x6] sm:$0x1] %v63
    %s65 = sadd.s32 %s30, 7
    %s66 = sld [smem:[#allocation3 + %s65]]
    %s67 = scalar_lea.vmem [#allocation4], %s66
    %v68 = vld [vmem:[%s67] sm:$0x1]
    %69 = vst [vmem:[#allocation7 + $0x7] sm:$0x1] %v68
    %s70 = sadd.s32 %s30, 8
    %s71 = sld [smem:[#allocation3 + %s70]]
    %s72 = scalar_lea.vmem [#allocation4], %s71
    %v73 = vld [vmem:[%s72] sm:$0x1]
    %74 = vst [vmem:[#allocation7 + $0x8] sm:$0x1] %v73
    %s75 = sadd.s32 %s30, 9
    %s76 = sld [smem:[#allocation3 + %s75]]
    %s77 = scalar_lea.vmem [#allocation4], %s76
    %v78 = vld [vmem:[%s77] sm:$0x1]
    %79 = vst [vmem:[#allocation7 + $0x9] sm:$0x1] %v78
    %s80 = sadd.s32 %s30, 10
    %s81 = sld [smem:[#allocation3 + %s80]]
    %s82 = scalar_lea.vmem [#allocation4], %s81
    %v83 = vld [vmem:[%s82] sm:$0x1]
    %84 = vst [vmem:[#allocation7 + $0xa] sm:$0x1] %v83
    %s85 = sadd.s32 %s30, 11
    %s86 = sld [smem:[#allocation3 + %s85]]
    %s87 = scalar_lea.vmem [#allocation4], %s86
    %v88 = vld [vmem:[%s87] sm:$0x1]
    %89 = vst [vmem:[#allocation7 + $0xb] sm:$0x1] %v88
    %s90 = sadd.s32 %s30, 12
    %s91 = sld [smem:[#allocation3 + %s90]]
    %s92 = scalar_lea.vmem [#allocation4], %s91
    %v93 = vld [vmem:[%s92] sm:$0x1]
    %94 = vst [vmem:[#allocation7 + $0xc] sm:$0x1] %v93
    %s95 = sadd.s32 %s30, 13
    %s96 = sld [smem:[#allocation3 + %s95]]
    %s97 = scalar_lea.vmem [#allocation4], %s96
    %v98 = vld [vmem:[%s97] sm:$0x1]
    %99 = vst [vmem:[#allocation7 + $0xd] sm:$0x1] %v98
    %s100 = sadd.s32 %s30, 14
    %s101 = sld [smem:[#allocation3 + %s100]]
    %s102 = scalar_lea.vmem [#allocation4], %s101
    %v103 = vld [vmem:[%s102] sm:$0x1]
    %104 = vst [vmem:[#allocation7 + $0xe] sm:$0x1] %v103
    %s105 = sadd.s32 %s30, 15
    %s106 = sld [smem:[#allocation3 + %s105]]
    %s107 = scalar_lea.vmem [#allocation4], %s106
    %v108 = vld [vmem:[%s107] sm:$0x1]
    %109 = vst [vmem:[#allocation7 + $0xf] sm:$0x1] %v108
    // Predicated region
    $region10: #{_gather_rows.1} parent=1 // pred_check
      _
    $region11: #{_gather_rows.1} parent=1 // pred_check_branch
      %111 = sbr.rel (0) target = $region13
    $region12: #{_gather_rows.1} parent=1 // pred_region
      %s113 = ssub.s32 256, 256
      %114 = vsyncadd [#allocation6], %s113
      %s115 = sshll.u32 [#allocation7], 4
      %s116 = int_to_ptr.vmem [resolvable:$true] %s115
      %121 = dma.vmem_to_hbm [thread:$0]  %s116, 256, %s2, [#allocation6], 128, 128, 8
    $region13: #{_gather_rows.1} parent=1 // pred_fallthru
      _
    // Predicated region
    $region14: #{_gather_rows.1} parent=1 // pred_check
      _
    $region15: #{_gather_rows.1} parent=1 // pred_check_branch
      %123 = sbr.rel (0) target = $region17
    $region16: #{_gather_rows.1} parent=1 // pred_region
      %124 = dma.done [#allocation6], 256
    $region17: #{_gather_rows.1} parent=1 // pred_fallthru
      _
    %125 = vsyncpa [#allocation5], 1
    %126 = vsyncpa [#allocation6], 1

</llo_original>
